<compile_context>
chip_gen: v7x
topology: tpu7x:2x2x1
jax: 0.10.0
libtpu: 0.0.40
codegen_flags: <defaults>
</compile_context>

<pallas_src>
import functools
import math

import jax
import jax.numpy as jnp
from jax import lax
from jax.experimental import pallas as pl
from jax.experimental.pallas import tpu as pltpu


def _linear_kernel(x_ref, w_ref, b_ref, o_ref, acc_ref, *, mxu_dtype, precision):
    """One (i, j, k) grid step of y = x @ W.T + b.

    x_ref:   (tm, tk)  activation tile
    w_ref:   (tn, tk)  weight tile in PyTorch (out, in) layout -- NOT transposed
    b_ref:   (1,  tn)  bias row, resident across i and k (index_map -> (0, j))
    o_ref:   (tm, tn)  output tile
    acc_ref: (tm, tn)  f32 accumulator scratch carried across the K axis
    """
    k = pl.program_id(2)

    # bf16 MXU operands, exact f32 accumulation of the bf16 products.
    # Contract K of x (axis 1) against K of W (axis 1): no weight transpose.
    partial = lax.dot_general(
        x_ref[...].astype(mxu_dtype),
        w_ref[...].astype(mxu_dtype),
        dimension_numbers=(((1,), (1,)), ((), ())),
        preferred_element_type=jnp.float32,
        precision=precision)

    # No separate zero-init pass: first K step overwrites, later steps add.
    @pl.when(k == 0)
    def _first():
        acc_ref[...] = partial

    @pl.when(k > 0)
    def _accum():
        acc_ref[...] += partial

    # Bias add + downcast only once, in the finalize step.
    @pl.when(k == pl.num_programs(2) - 1)
    def _finalize():
        o_ref[...] = (acc_ref[...] + b_ref[...].astype(jnp.float32)).astype(o_ref.dtype)


def _round_up(x, m):
    return ((x + m - 1) // m) * m


def meta_linear_forward(x, weight, bias, *, tm=512, tn=512, tk=1024,
                        mxu_dtype=jnp.bfloat16):
    """Pallas equivalent of MetaLinearLayer.forward.

    x:      (..., K)  -- all leading dims (task, batch, ...) are folded into M
    weight: (N, K)    -- PyTorch (output_shape, input_shape) layout
    bias:   (N,)
    returns (..., N) in x.dtype
    """
    *lead, K = x.shape
    N, K2 = weight.shape
    assert K == K2, "input_shape mismatch"
    assert bias.shape == (N,)

    M = int(math.prod(lead)) if lead else 1
    x2 = x.reshape(M, K)

    # (8, 128)-aligned tiles, capped by the rounded-up dims.  Inputs are
    # zero-padded to tile multiples so the grid always tiles evenly: no
    # full-extent fallback block (latent VMEM OOM on awkward shapes) and
    # lane-dense (>=128 wide) output stores.  Padding waste < one tile per dim.
    tm = min(tm, _round_up(M, 8))
    tn = min(tn, _round_up(N, 128))
    tk = min(tk, _round_up(K, 128))
    Mp, Np, Kp = _round_up(M, tm), _round_up(N, tn), _round_up(K, tk)

    xp = x2 if (Mp == M and Kp == K) else jnp.pad(x2, ((0, Mp - M), (0, Kp - K)))
    wp = weight if (Np == N and Kp == K) else jnp.pad(weight, ((0, Np - N), (0, Kp - K)))
    bp = bias if Np == N else jnp.pad(bias, (0, Np - N))
    b2 = bp.reshape(1, Np)  # lane-dim broadcast row

    grid = (Mp // tm, Np // tn, Kp // tk)

    # Exact-parity option: f32 MXU path uses HIGHEST (multi-pass) precision.
    precision = lax.Precision.HIGHEST if mxu_dtype == jnp.float32 else None
    kernel = functools.partial(_linear_kernel, mxu_dtype=mxu_dtype, precision=precision)

    itemsize = jnp.dtype(x.dtype).itemsize
    cost = pl.CostEstimate(
        flops=2 * Mp * Np * Kp,
        transcendentals=0,
        bytes_accessed=(Mp * Kp + Np * Kp + Np + Mp * Np) * itemsize)

    out = pl.pallas_call(
        kernel,
        out_shape=jax.ShapeDtypeStruct((Mp, Np), x.dtype),
        grid_spec=pltpu.PrefetchScalarGridSpec(
            num_scalar_prefetch=0,
            grid=grid,
            in_specs=[
                pl.BlockSpec((tm, tk), lambda i, j, k: (i, k)),   # x
                pl.BlockSpec((tn, tk), lambda i, j, k: (j, k)),   # W, native (N, K) layout
                pl.BlockSpec((1, tn), lambda i, j, k: (0, j)),    # bias (resident over i, k)
            ],
            out_specs=pl.BlockSpec((tm, tn), lambda i, j, k: (i, j)),
            scratch_shapes=[pltpu.VMEM((tm, tn), jnp.float32)],
        ),
        compiler_params=pltpu.CompilerParams(
            # M/N parallel -> megacore sharding on v7x; K carries the
            # accumulator so it must be "arbitrary" (and is the last grid axis).
            dimension_semantics=("parallel", "parallel", "arbitrary")),
        cost_estimate=cost,
    )(xp, wp, b2)

    if Mp != M or Np != N:
        out = out[:M, :N]
    return out.reshape(*lead, N)


def init_meta_linear_params(key, input_shape, output_shape):
    """Deterministic parameter init matching MetaLinearLayer.__init__.

    weights: xavier_uniform_ on (output_shape, input_shape)
             -> U(-a, a) with a = sqrt(6 / (fan_in + fan_out))
    bias:    zeros(output_shape)
    """
    a = math.sqrt(6.0 / (input_shape + output_shape))
    weights = jax.random.uniform(
        key, (output_shape, input_shape), dtype=jnp.float32, minval=-a, maxval=a)
    bias = jnp.zeros((output_shape,), dtype=jnp.float32)
    return weights, bias


if __name__ == "__main__":
    key = jax.random.PRNGKey(0)
    k_w, k_x, k_x3, k_w2, k_x2 = jax.random.split(key, 5)

    def ref_linear(x, w, b, mxu_dtype=jnp.bfloat16):
        # Reference with the same bf16 operand rounding, f32 HIGHEST accumulation.
        xd = x.astype(mxu_dtype).astype(jnp.float32)
        wd = w.astype(mxu_dtype).astype(jnp.float32)
        return jnp.dot(xd, wd.T, precision=lax.Precision.HIGHEST) + b

    # --- MAML inner-loop shape: batch=8, hidden 32 -> 32 (padded to 128 lanes inside). ---
    batch, input_shape, output_shape = 8, 32, 32
    weights, bias = init_meta_linear_params(k_w, input_shape, output_shape)
    x = jax.random.normal(k_x, (batch, input_shape), dtype=jnp.float32)

    y = jax.block_until_ready(meta_linear_forward(x, weights, bias))
    y_ref = ref_linear(x, weights, bias)
    assert y.shape == (batch, output_shape)
    assert jnp.allclose(y, y_ref, atol=1e-3, rtol=1e-3), float(jnp.max(jnp.abs(y - y_ref)))

    # --- Task-batched call: leading (tasks, batch) dims folded into M (per perf guidance). ---
    tasks = 4
    x3 = jax.random.normal(k_x3, (tasks, batch, input_shape), dtype=jnp.float32)
    y3 = jax.block_until_ready(meta_linear_forward(x3, weights, bias))
    y3_ref = ref_linear(x3.reshape(-1, input_shape), weights, bias
                        ).reshape(tasks, batch, output_shape)
    assert y3.shape == (tasks, batch, output_shape)
    assert jnp.allclose(y3, y3_ref, atol=1e-3, rtol=1e-3), float(jnp.max(jnp.abs(y3 - y3_ref)))

    # --- Awkward shape exercising the tiled/pipelined path with padding: grid (2, 3, 3). ---
    M2, K2, N2 = 256, 600, 320
    w2, b2 = init_meta_linear_params(k_w2, K2, N2)
    x2 = jax.random.normal(k_x2, (M2, K2), dtype=jnp.float32)
    y2 = jax.block_until_ready(meta_linear_forward(x2, w2, b2, tm=128, tn=128, tk=256))
    y2_ref = ref_linear(x2, w2, b2)
    assert y2.shape == (M2, N2)
    assert jnp.allclose(y2, y2_ref, atol=2e-3, rtol=2e-3), float(jnp.max(jnp.abs(y2 - y2_ref)))

    print("KERNEL_OK")
</pallas_src>

<mosaic_0001>
module attributes {stable_mosaic.version = 11 : i64} {
  func.func @_linear_kernel(%arg0: i32, %arg1: i32, %arg2: i32, %arg3: memref<8x128xf32, #tpu.memory_space<vmem>>, %arg4: memref<128x128xf32, #tpu.memory_space<vmem>>, %arg5: memref<1x128xf32, #tpu.memory_space<vmem>>, %arg6: memref<8x128xf32, #tpu.memory_space<vmem>>, %arg7: memref<8x128xf32, #tpu.memory_space<vmem>>) attributes {dimension_semantics = [#tpu.dimension_semantics<parallel>, #tpu.dimension_semantics<parallel>, #tpu.dimension_semantics<arbitrary>], iteration_bounds = array<i64: 1, 1, 1>, scalar_prefetch = 0 : i64, scratch_operands = 1 : i64, tpu.core_type = #tpu.core_type<tc>, window_params = [{transform_indices = @transform_0, window_bounds = array<i64: 8, 128>}, {transform_indices = @transform_1, window_bounds = array<i64: 128, 128>}, {transform_indices = @transform_2, window_bounds = array<i64: 1, 128>}, {transform_indices = @transform_3, window_bounds = array<i64: 8, 128>}]} {
    %c0 = arith.constant 0 : index
    %c0_0 = arith.constant 0 : index
    %0 = vector.load %arg3[%c0, %c0_0] : memref<8x128xf32, #tpu.memory_space<vmem>>, vector<8x128xf32>
    %1 = arith.truncf %0 : vector<8x128xf32> to vector<8x128xbf16>
    %c0_1 = arith.constant 0 : index
    %c0_2 = arith.constant 0 : index
    %2 = vector.load %arg4[%c0_1, %c0_2] : memref<128x128xf32, #tpu.memory_space<vmem>>, vector<128x128xf32>
    %3 = arith.truncf %2 : vector<128x128xf32> to vector<128x128xbf16>
    %cst = arith.constant dense<0.000000e+00> : vector<8x128xf32>
    %4 = tpu.matmul %1, %3, %cst {dimension_numbers = #tpu.dot_dimension_numbers<[1], [1], [0], [0], [0, 0, 1, 0], [], []>} : vector<8x128xbf16>, vector<128x128xbf16>, vector<8x128xf32> -> vector<8x128xf32>
    %c0_i32 = arith.constant 0 : i32
    %5 = arith.cmpi eq, %arg2, %c0_i32 : i32
    %6 = arith.extui %5 : i1 to i32
    %c0_i32_3 = arith.constant 0 : i32
    %7 = arith.cmpi ne, %6, %c0_i32_3 : i32
    scf.if %7 {
      %c0_8 = arith.constant 0 : index
      %c0_9 = arith.constant 0 : index
      %14 = vector.load %arg7[%c0_8, %c0_9] : memref<8x128xf32, #tpu.memory_space<vmem>>, vector<8x128xf32>
      tpu.vector_store %arg7[%c0_8, %c0_9], %4 {strides = array<i32>} : memref<8x128xf32, #tpu.memory_space<vmem>>, vector<8x128xf32>,
    } else {
    }
    %c0_i32_4 = arith.constant 0 : i32
    %8 = arith.cmpi sgt, %arg2, %c0_i32_4 : i32
    %9 = arith.extui %8 : i1 to i32
    %c0_i32_5 = arith.constant 0 : i32
    %10 = arith.cmpi ne, %9, %c0_i32_5 : i32
    scf.if %10 {
      %c0_8 = arith.constant 0 : index
      %c0_9 = arith.constant 0 : index
      %14 = vector.load %arg7[%c0_8, %c0_9] : memref<8x128xf32, #tpu.memory_space<vmem>>, vector<8x128xf32>
      %15 = arith.addf %14, %4 : vector<8x128xf32>
      %c0_10 = arith.constant 0 : index
      %c0_11 = arith.constant 0 : index
      %16 = vector.load %arg7[%c0_10, %c0_11] : memref<8x128xf32, #tpu.memory_space<vmem>>, vector<8x128xf32>
      tpu.vector_store %arg7[%c0_10, %c0_11], %15 {strides = array<i32>} : memref<8x128xf32, #tpu.memory_space<vmem>>, vector<8x128xf32>,
    } else {
    }
    %c0_i32_6 = arith.constant 0 : i32
    %11 = arith.cmpi eq, %arg2, %c0_i32_6 : i32
    %12 = arith.extui %11 : i1 to i32
    %c0_i32_7 = arith.constant 0 : i32
    %13 = arith.cmpi ne, %12, %c0_i32_7 : i32
    scf.if %13 {
      %c0_8 = arith.constant 0 : index
      %c0_9 = arith.constant 0 : index
      %14 = vector.load %arg7[%c0_8, %c0_9] : memref<8x128xf32, #tpu.memory_space<vmem>>, vector<8x128xf32>
      %c0_10 = arith.constant 0 : index
      %c0_11 = arith.constant 0 : index
      %15 = vector.load %arg5[%c0_10, %c0_11] : memref<1x128xf32, #tpu.memory_space<vmem>>, vector<1x128xf32>
      %16 = vector.broadcast %15 : vector<1x128xf32> to vector<8x128xf32>
      %17 = arith.addf %14, %16 : vector<8x128xf32>
      %c0_12 = arith.constant 0 : index
      %c0_13 = arith.constant 0 : index
      %18 = vector.load %arg6[%c0_12, %c0_13] : memref<8x128xf32, #tpu.memory_space<vmem>>, vector<8x128xf32>
      tpu.vector_store %arg6[%c0_12, %c0_13], %17 {strides = array<i32>} : memref<8x128xf32, #tpu.memory_space<vmem>>, vector<8x128xf32>,
    } else {
    }
    return
  }
  func.func @transform_0(%arg0: i32, %arg1: i32, %arg2: i32) -> (i32, i32) {
    %c0_i32 = arith.constant 0 : i32
    return %arg0, %arg2 : i32, i32
  }
  func.func @transform_1(%arg0: i32, %arg1: i32, %arg2: i32) -> (i32, i32) {
    %c0_i32 = arith.constant 0 : i32
    return %arg1, %arg2 : i32, i32
  }
  func.func @transform_2(%arg0: i32, %arg1: i32, %arg2: i32) -> (i32, i32) {
    %c0_i32 = arith.constant 0 : i32
    %c0_i32_0 = arith.constant 0 : i32
    return %c0_i32, %arg1 : i32, i32
  }
  func.func @transform_3(%arg0: i32, %arg1: i32, %arg2: i32) -> (i32, i32) {
    %c0_i32 = arith.constant 0 : i32
    return %arg0, %arg1 : i32, i32
  }
}

</mosaic_0001>

<llo_original>
// kernel: tpu_custom_call.1
$region0: #{tpu_custom_call.1}
  #allocation0 [shape = 'u32[]', space=smem, size = 0x4, offset = 0x4, fixed_abs, tag = 'smem constant byte address 0x4 - core index']
  #allocation1 [shape = 'u32[144,128]{1,0:T(1,128)}', space=vmem, size = 0x12000, scoped, tag = 'internal scratch']
  #allocation2 [shape = 'f32[8,128]{1,0:T(8,128)}', space=vmem, size = 0x1000, scoped, tag = 'scratch operand']
  %s0 = inlined_call_operand.hbm [shape: f32[8,128], index: 0, kind: input, shape index: {}]
  %s1 = inlined_call_operand.hbm [shape: f32[128,128], index: 1, kind: input, shape index: {}]
  %s2 = inlined_call_operand.vmem [shape: f32[1,128], index: 2, kind: input, shape index: {}]
  %s3 = inlined_call_operand.hbm [shape: f32[8,128], index: 3, kind: output, shape index: {}]
  %s4 = sld [smem:[#allocation0]]
  $region42: #{tpu_custom_call.1} parent=0
    _
  %s6 = ssub.s32 1, %s4
  %s7 = scalar_select 0, %s6, %s4
  $region1: #{tpu_custom_call.1} parent=0
    #allocation3 [shape = 'u8[4096]{0}', space=vmem, size = 0x1000, scoped, tag = 'input window, operand 0, single buffered']
    #allocation4 [shape = 's32[1]{0}', space=sflag, size = 0x4, scoped, tag = 'scoped memory for tpu_custom_call.1']
    #allocation5 [shape = 's32[1]{0}', space=sflag, size = 0x4, scoped, tag = 'scoped memory for tpu_custom_call.1']
    #allocation6 [shape = 'u8[65536]{0}', space=vmem, size = 0x10000, scoped, tag = 'input window, operand 1, single buffered']
    #allocation7 [shape = 's32[1]{0}', space=sflag, size = 0x4, scoped, tag = 'scoped memory for tpu_custom_call.1']
    #allocation8 [shape = 'u8[4096]{0}', space=vmem, size = 0x1000, scoped, tag = 'output window, operand 0, single buffered']
    %8 = vsyncpa [#allocation4], 0
    %9 = vsyncpa [#allocation7], 0
    %10 = vsyncpa [#allocation5], 0
    // Predicated region
    $region2: #{tpu_custom_call.1} parent=1 // pred_check
      _
    $region3: #{tpu_custom_call.1} parent=1 // pred_check_branch
      %12 = sbr.rel (0) target = $region5
    $region4: #{tpu_custom_call.1} parent=1 // pred_region
      %s14 = ssub.s32 128, 128
      %15 = vsyncadd [#allocation4], %s14
      %s17 = sshll.u32 [#allocation3], 4
      %s18 = int_to_ptr.vmem [resolvable:$true] %s17
      %20 = dma.hbm_to_vmem [thread:$0]  %s0, 128, %s18, [#allocation4]
    $region5: #{tpu_custom_call.1} parent=1 // pred_fallthru
      _
    // Predicated region
    $region6: #{tpu_custom_call.1} parent=1 // pred_check
      _
    $region7: #{tpu_custom_call.1} parent=1 // pred_check_branch
      %22 = sbr.rel (0) target = $region9
    $region8: #{tpu_custom_call.1} parent=1 // pred_region
      %s24 = ssub.s32 2048, 2048
      %25 = vsyncadd [#allocation7], %s24
      %s26 = sshll.u32 [#allocation6], 4
      %s27 = int_to_ptr.vmem [resolvable:$true] %s26
      %32 = dma.hbm_to_vmem [thread:$0]  %s1, 2048, %s27, [#allocation7], 128, 128, 8
    $region9: #{tpu_custom_call.1} parent=1 // pred_fallthru
      _
    // Predicated region
    $region10: #{tpu_custom_call.1} parent=1 // pred_check
      _
    $region11: #{tpu_custom_call.1} parent=1 // pred_check_branch
      %34 = sbr.rel (0) target = $region13
    $region12: #{tpu_custom_call.1} parent=1 // pred_region
      _
    $region13: #{tpu_custom_call.1} parent=1 // pred_fallthru
      _
    // Predicated region
    $region14: #{tpu_custom_call.1} parent=1 // pred_check
      _
    $region15: #{tpu_custom_call.1} parent=1 // pred_check_branch
      %36 = sbr.rel (0) target = $region17
    $region16: #{tpu_custom_call.1} parent=1 // pred_region
      %37 = dma.done [#allocation4], 128
    $region17: #{tpu_custom_call.1} parent=1 // pred_fallthru
      _
    // Predicated region
    $region18: #{tpu_custom_call.1} parent=1 // pred_check
      _
    $region19: #{tpu_custom_call.1} parent=1 // pred_check_branch
      %39 = sbr.rel (0) target = $region21
    $region20: #{tpu_custom_call.1} parent=1 // pred_region
      %40 = dma.done [#allocation7], 2048
    $region21: #{tpu_custom_call.1} parent=1 // pred_fallthru
      _
    %v42 = vld [vmem:[#allocation3] sm:$0xff]
    %v43 = vpack.c.bf16 %v42, %v42
    %v44 = vld [vmem:[#allocation6] sm:$0xff]
    %v45 = vld [vmem:[#allocation6 + $0x8] sm:$0xff]
    %v46 = vld [vmem:[#allocation6 + $0x10] sm:$0xff]
    %v47 = vld [vmem:[#allocation6 + $0x18] sm:$0xff]
    %v48 = vld [vmem:[#allocation6 + $0x20] sm:$0xff]
    %v49 = vld [vmem:[#allocation6 + $0x28] sm:$0xff]
    %v50 = vld [vmem:[#allocation6 + $0x30] sm:$0xff]
    %v51 = vld [vmem:[#allocation6 + $0x38] sm:$0xff]
    %v52 = vld [vmem:[#allocation6 + $0x40] sm:$0xff]
    %v53 = vld [vmem:[#allocation6 + $0x48] sm:$0xff]
    %v54 = vld [vmem:[#allocation6 + $0x50] sm:$0xff]
    %v55 = vld [vmem:[#allocation6 + $0x58] sm:$0xff]
    %v56 = vld [vmem:[#allocation6 + $0x60] sm:$0xff]
    %v57 = vld [vmem:[#allocation6 + $0x68] sm:$0xff]
    %v58 = vld [vmem:[#allocation6 + $0x70] sm:$0xff]
    %v59 = vld [vmem:[#allocation6 + $0x78] sm:$0xff]
    %v60 = vpack.c.bf16 %v45, %v44
    %v61 = vpack.c.bf16 %v47, %v46
    %v62 = vpack.c.bf16 %v49, %v48
    %v63 = vpack.c.bf16 %v51, %v50
    %v64 = vpack.c.bf16 %v53, %v52
    %v65 = vpack.c.bf16 %v55, %v54
    %v66 = vpack.c.bf16 %v57, %v56
    %v67 = vpack.c.bf16 %v59, %v58
    %68 = vmatprep.subr.bf16.mxu0 0
    %69 = vmatpush1.bf16.xpose.msra.mxu0 %v60
    %70 = vmatprep.subr.bf16.mxu0 0
    %71 = vmatpush1.bf16.xpose.msra.mxu0 %v61
    %72 = vmatprep.subr.bf16.mxu0 0
    %73 = vmatpush1.bf16.xpose.msra.mxu0 %v62
    %74 = vmatprep.subr.bf16.mxu0 0
    %75 = vmatpush1.bf16.xpose.msra.mxu0 %v63
    %76 = vmatprep.subr.bf16.mxu0 0
    %77 = vmatpush1.bf16.xpose.msra.mxu0 %v64
    %78 = vmatprep.subr.bf16.mxu0 0
    %79 = vmatpush1.bf16.xpose.msra.mxu0 %v65
    %80 = vmatprep.subr.bf16.mxu0 0
    %81 = vmatpush1.bf16.xpose.msra.mxu0 %v66
    %82 = vmatprep.subr.bf16.mxu0 0
    %83 = vmatpush1.bf16.xpose.msra.mxu0 %v67
    %84 = vmatprep.subr.bf16.mxu0 0
    %85 = vmatpush1.bf16.xpose.msra.mxu0 0
    %86 = vmatprep.subr.bf16.mxu0 0
    %87 = vmatpush1.bf16.xpose.msra.mxu0 0
    %88 = vmatprep.subr.bf16.mxu0 0
    %89 = vmatpush1.bf16.xpose.msra.mxu0 0
    %90 = vmatprep.subr.bf16.mxu0 0
    %91 = vmatpush1.bf16.xpose.msra.mxu0 0
    %92 = vmatprep.subr.bf16.mxu0 0
    %93 = vmatpush1.bf16.xpose.msra.mxu0 0
    %94 = vmatprep.subr.bf16.mxu0 0
    %95 = vmatpush1.bf16.xpose.msra.mxu0 0
    %96 = vmatprep.subr.bf16.mxu0 0
    %97 = vmatpush1.bf16.xpose.msra.mxu0 0
    %98 = vmatprep.subr.bf16.mxu0 0
    %99 = vmatpush1.bf16.xpose.msra.mxu0 0
    %100 = vmatprep.mubr.bf16.mxu0 0
    %101 = vmatmul.mubr.bf16.gmra.mrb[0].mxu0 %v43
    %v102 = vpop.f32.mrb[0].mxu0
    %v103 = vadd.f32 0.0, %v102
    %v104 = vpop.f32.mrb[0].mxu0
    %v105 = vpop.f32.mrb[0].mxu0
    %v106 = vpop.f32.mrb[0].mxu0
    %107 = vdwg.mxu0
    %p108 = scmp.eq.s32.totalorder 0, 0
    // Predicated region
    $region22: #{tpu_custom_call.1} parent=1 // pred_check
      %p109 = pneg %p108
    $region23: #{tpu_custom_call.1} parent=1 // pred_check_branch
      %111 = sbr.rel (%p109) target = $region25
    $region24: #{tpu_custom_call.1} parent=1 // pred_region
      %112 = vst [vmem:[#allocation2] sm:$0xff] %v103
    $region25: #{tpu_custom_call.1} parent=1 // pred_fallthru
      _
    %p113 = scmp.gt.s32.totalorder 0, 0
    // Predicated region
    $region26: #{tpu_custom_call.1} parent=1 // pred_check
      %p114 = pneg %p113
    $region27: #{tpu_custom_call.1} parent=1 // pred_check_branch
      %116 = sbr.rel (%p114) target = $region29
    $region28: #{tpu_custom_call.1} parent=1 // pred_region
      %v117 = vld [vmem:[#allocation2] sm:$0xff]
      %v118 = vadd.f32 %v117, %v103
      %119 = vst [vmem:[#allocation2] sm:$0xff] %v118
    $region29: #{tpu_custom_call.1} parent=1 // pred_fallthru
      _
    // Predicated region
    $region30: #{tpu_custom_call.1} parent=1 // pred_check
      %p120 = pneg %p108
    $region31: #{tpu_custom_call.1} parent=1 // pred_check_branch
      %122 = sbr.rel (%p120) target = $region33
    $region32: #{tpu_custom_call.1} parent=1 // pred_region
      %v123 = vld [vmem:[#allocation2] sm:$0xff]
      %v124 = vld [vmem:[%s2] sm:$0x1]
      %v126 = vlaneseq
      %v127 = vshrl.u32 %v126, 7
      %v128 = vsub.s32 0, %v127
      %v129 = vrot.slane %v124, %v128
      %v131 = vadd.f32 %v123, %v129
      %132 = vst [vmem:[#allocation8] sm:$0xff] %v131
    $region33: #{tpu_custom_call.1} parent=1 // pred_fallthru
      _
    // Predicated region
    $region34: #{tpu_custom_call.1} parent=1 // pred_check
      _
    $region35: #{tpu_custom_call.1} parent=1 // pred_check_branch
      %134 = sbr.rel (0) target = $region37
    $region36: #{tpu_custom_call.1} parent=1 // pred_region
      %s136 = ssub.s32 128, 128
      %137 = vsyncadd [#allocation5], %s136
      %s139 = sshll.u32 [#allocation8], 4
      %s140 = int_to_ptr.vmem [resolvable:$true] %s139
      %142 = dma.vmem_to_hbm [thread:$0]  %s140, 128, %s3, [#allocation5]
    $region37: #{tpu_custom_call.1} parent=1 // pred_fallthru
      _
    // Predicated region
    $region38: #{tpu_custom_call.1} parent=1 // pred_check
      _
    $region39: #{tpu_custom_call.1} parent=1 // pred_check_branch
      %144 = sbr.rel (0) target = $region41
    $region40: #{tpu_custom_call.1} parent=1 // pred_region
      %145 = dma.done [#allocation5], 128
    $region41: #{tpu_custom_call.1} parent=1 // pred_fallthru
      _
    %146 = vsyncpa [#allocation4], 1
    %147 = vsyncpa [#allocation7], 1
    %148 = vsyncpa [#allocation5], 1

</llo_original>
